<compile_context>
chip_gen: v7x
topology: tpu7x:2x2x1
jax: 0.10.0
libtpu: 0.0.40
codegen_flags: <defaults>
</compile_context>

<pallas_src>
import functools
import math

import jax
import jax.numpy as jnp
from jax.experimental import pallas as pl
from jax.experimental.pallas import tpu as pltpu


def _pick_tile(n, target):
    """Largest sublane-aligned tile <= target that exactly divides n.

    If n itself is <= target, the full dimension is always a legal block.
    """
    if n <= target:
        return n
    best = None
    for t in range(8, target + 1, 8):
        if n % t == 0:
            best = t
    return best if best is not None else n


# --------------------------------------------------------------------------
# Linear:  out = x @ W + b      (row-tiled, weight resident)
# --------------------------------------------------------------------------
def _linear_kernel(x_ref, w_ref, b_ref, o_ref):
    # x_ref: (tm, K), w_ref: (K, N), b_ref: (1, N), o_ref: (tm, N)
    acc = jnp.dot(x_ref[...], w_ref[...], preferred_element_type=jnp.float32)
    o_ref[...] = (acc + b_ref[...]).astype(o_ref.dtype)


def linear(x2, w, b, *, tm=None):
    """x2: (M, K) @ w: (K, N) + b: (N,) -> (M, N)."""
    M, K = x2.shape
    N = w.shape[1]
    if tm is None:
        tm = _pick_tile(M, 256)      # feed the MXU; amortise per-step overhead
    assert M % tm == 0, "row count must be divisible by the row tile"

    return pl.pallas_call(
        _linear_kernel,
        out_shape=jax.ShapeDtypeStruct((M, N), x2.dtype),
        grid_spec=pltpu.PrefetchScalarGridSpec(
            num_scalar_prefetch=0,
            grid=(M // tm,),
            in_specs=[
                pl.BlockSpec((tm, K), lambda i: (i, 0)),    # x row tile
                pl.BlockSpec((K, N), lambda i: (0, 0)),     # W (resident)
                pl.BlockSpec((1, N), lambda i: (0, 0)),     # b
            ],
            out_specs=pl.BlockSpec((tm, N), lambda i: (i, 0)),
        ),
        compiler_params=pltpu.CompilerParams(
            dimension_semantics=("parallel",)),
        cost_estimate=pl.CostEstimate(
            flops=2 * M * K * N,
            transcendentals=0,
            bytes_accessed=4 * (M * K + K * N + N + M * N)),
    )(x2, w, b.reshape(1, N))


# --------------------------------------------------------------------------
# Flash attention (online softmax) over a (B*H, q-tile, kv-tile) grid
# --------------------------------------------------------------------------
def _flash_attn_kernel(q_ref, k_ref, v_ref, o_ref, m_sc, l_sc, acc_sc, *,
                       scale):
    kv = pl.program_id(2)

    @pl.when(kv == 0)
    def _():
        m_sc[...] = jnp.full_like(m_sc, -jnp.inf)
        l_sc[...] = jnp.zeros_like(l_sc)
        acc_sc[...] = jnp.zeros_like(acc_sc)

    # q_ref/k_ref/v_ref are (1, tile, d_k)
    s = jnp.einsum("bqd,bkd->bqk", q_ref[...], k_ref[...],
                   preferred_element_type=jnp.float32) * scale   # (1, tq, tk)

    m_prev = m_sc[...]
    m_new = jnp.maximum(m_prev, s.max(-1, keepdims=True))
    alpha = jnp.exp(m_prev - m_new)
    p = jnp.exp(s - m_new)
    l_sc[...] = alpha * l_sc[...] + p.sum(-1, keepdims=True)
    acc_sc[...] = alpha * acc_sc[...] + jnp.einsum(
        "bqk,bkd->bqd", p.astype(v_ref.dtype), v_ref[...],
        preferred_element_type=jnp.float32)
    m_sc[...] = m_new

    @pl.when(kv == pl.num_programs(2) - 1)
    def _():
        # dropout on attention probs: identity (eval mode)
        o_ref[...] = (acc_sc[...] / l_sc[...]).astype(o_ref.dtype)


def flash_attention(qh, kh, vh, *, tq=None, tk=None):
    """qh: (B*H, Sq, d_k), kh/vh: (B*H, Skv, d_k) -> (B*H, Sq, d_k)."""
    BH, Sq, d_k = qh.shape
    Skv = kh.shape[1]
    if tq is None:
        tq = _pick_tile(Sq, 128)
    if tk is None:
        tk = _pick_tile(Skv, 128)
    assert Sq % tq == 0 and Skv % tk == 0

    scale = 1.0 / math.sqrt(d_k)
    kernel = functools.partial(_flash_attn_kernel, scale=scale)

    return pl.pallas_call(
        kernel,
        out_shape=jax.ShapeDtypeStruct((BH, Sq, d_k), qh.dtype),
        grid_spec=pltpu.PrefetchScalarGridSpec(
            num_scalar_prefetch=0,
            grid=(BH, Sq // tq, Skv // tk),
            in_specs=[
                pl.BlockSpec((1, tq, d_k), lambda b, qi, ki: (b, qi, 0)),
                pl.BlockSpec((1, tk, d_k), lambda b, qi, ki: (b, ki, 0)),
                pl.BlockSpec((1, tk, d_k), lambda b, qi, ki: (b, ki, 0)),
            ],
            out_specs=pl.BlockSpec((1, tq, d_k), lambda b, qi, ki: (b, qi, 0)),
            scratch_shapes=[
                pltpu.VMEM((1, tq, 1), jnp.float32),     # running max
                pltpu.VMEM((1, tq, 1), jnp.float32),     # running denom
                pltpu.VMEM((1, tq, d_k), jnp.float32),   # f32 accumulator
            ],
        ),
        compiler_params=pltpu.CompilerParams(
            dimension_semantics=("parallel", "parallel", "arbitrary")),
        cost_estimate=pl.CostEstimate(
            flops=4 * BH * Sq * Skv * d_k,
            transcendentals=BH * Sq * Skv,
            bytes_accessed=4 * (BH * Sq * d_k + 2 * BH * Skv * d_k
                                + BH * Sq * d_k)),
    )(qh, kh, vh)


# --------------------------------------------------------------------------
# Full MultiHeadAttention forward
# --------------------------------------------------------------------------
def multi_head_attention(q, k, v, params, *, heads):
    """q: (B, Sq, d_model), k/v: (B, Skv, d_model) -> (B, Sq, d_model)."""
    wq, bq, wk, bk, wv, bv, wo, bo = params
    B, Sq, d_model = q.shape
    Skv = k.shape[1]
    assert d_model % heads == 0
    d_k = d_model // heads

    # Q/K/V projections (row-tiled Pallas linears)
    qp = linear(q.reshape(B * Sq, d_model), wq, bq)
    kp = linear(k.reshape(B * Skv, d_model), wk, bk)
    vp = linear(v.reshape(B * Skv, d_model), wv, bv)

    def split_heads(x, S):
        # (B*S, d_model) -> (B, H, S, d_k) -> (B*H, S, d_k)
        return (x.reshape(B, S, heads, d_k)
                 .transpose(0, 2, 1, 3)
                 .reshape(B * heads, S, d_k))

    qh = split_heads(qp, Sq)
    kh = split_heads(kp, Skv)
    vh = split_heads(vp, Skv)

    ctx = flash_attention(qh, kh, vh)                     # (B*H, Sq, d_k)

    concat = (ctx.reshape(B, heads, Sq, d_k)
                 .transpose(0, 2, 1, 3)
                 .reshape(B * Sq, d_model))
    out = linear(concat, wo, bo)
    return out.reshape(B, Sq, d_model)


def init_params(key, d_model):
    """nn.Linear-style init: U(-1/sqrt(fan_in), 1/sqrt(fan_in)); weights are
    stored (in, out) so x @ W matches PyTorch's x @ weight.T convention."""
    ks = jax.random.split(key, 8)
    lim = 1.0 / math.sqrt(d_model)

    def lin(kw, kb):
        w = jax.random.uniform(kw, (d_model, d_model), jnp.float32, -lim, lim)
        b = jax.random.uniform(kb, (d_model,), jnp.float32, -lim, lim)
        return w, b

    wq, bq = lin(ks[0], ks[1])
    wk, bk = lin(ks[2], ks[3])
    wv, bv = lin(ks[4], ks[5])
    wo, bo = lin(ks[6], ks[7])
    return (wq, bq, wk, bk, wv, bv, wo, bo)


if __name__ == "__main__":
    key = jax.random.PRNGKey(0)
    batch, seq, heads, d_model = 2, 8, 4, 32

    kq, kk, kv_, kp = jax.random.split(key, 4)
    q = jax.random.normal(kq, (batch, seq, d_model), jnp.float32)
    k = jax.random.normal(kk, (batch, seq, d_model), jnp.float32)
    v = jax.random.normal(kv_, (batch, seq, d_model), jnp.float32)
    params = init_params(kp, d_model)

    out = multi_head_attention(q, k, v, params, heads=heads)
    out = jax.block_until_ready(out)

    # ---- plain-JAX reference (mask=None, dropout=identity in eval mode) ----
    wq, bq, wk, bk, wv, bv, wo, bo = params
    d_k = d_model // heads

    def proj(x, w, b):
        return x @ w + b

    qh_r = proj(q, wq, bq).reshape(batch, seq, heads, d_k).transpose(0, 2, 1, 3)
    kh_r = proj(k, wk, bk).reshape(batch, seq, heads, d_k).transpose(0, 2, 1, 3)
    vh_r = proj(v, wv, bv).reshape(batch, seq, heads, d_k).transpose(0, 2, 1, 3)
    scores = jnp.einsum("bhqd,bhkd->bhqk", qh_r, kh_r) / math.sqrt(d_k)
    probs = jax.nn.softmax(scores, axis=-1)
    ctx_r = jnp.einsum("bhqk,bhkd->bhqd", probs, vh_r)
    concat_r = ctx_r.transpose(0, 2, 1, 3).reshape(batch, seq, d_model)
    ref = concat_r @ wo + bo

    assert out.shape == (batch, seq, d_model)
    err = float(jnp.max(jnp.abs(out - ref)))
    assert jnp.allclose(out, ref, atol=1e-4, rtol=1e-4), f"max abs err {err}"

    print("KERNEL_OK")
</pallas_src>

<mosaic_0001>
module attributes {stable_mosaic.version = 11 : i64} {
  func.func @_linear_kernel(%arg0: i32, %arg1: memref<16x32xf32, #tpu.memory_space<vmem>>, %arg2: memref<32x32xf32, #tpu.memory_space<vmem>>, %arg3: memref<1x32xf32, #tpu.memory_space<vmem>>, %arg4: memref<16x32xf32, #tpu.memory_space<vmem>>) attributes {dimension_semantics = [#tpu.dimension_semantics<parallel>], iteration_bounds = array<i64: 1>, scalar_prefetch = 0 : i64, scratch_operands = 0 : i64, tpu.core_type = #tpu.core_type<tc>, window_params = [{transform_indices = @transform_0, window_bounds = array<i64: 16, 32>}, {pipeline_mode = #tpu.pipeline_mode<synchronous>, transform_indices = @transform_1, window_bounds = array<i64: 32, 32>}, {pipeline_mode = #tpu.pipeline_mode<synchronous>, transform_indices = @transform_2, window_bounds = array<i64: 1, 32>}, {transform_indices = @transform_3, window_bounds = array<i64: 16, 32>}]} {
    %c0 = arith.constant 0 : index
    %c0_0 = arith.constant 0 : index
    %0 = vector.load %arg1[%c0, %c0_0] : memref<16x32xf32, #tpu.memory_space<vmem>>, vector<16x32xf32>
    %c0_1 = arith.constant 0 : index
    %c0_2 = arith.constant 0 : index
    %1 = vector.load %arg2[%c0_1, %c0_2] : memref<32x32xf32, #tpu.memory_space<vmem>>, vector<32x32xf32>
    %cst = arith.constant dense<0.000000e+00> : vector<16x32xf32>
    %2 = tpu.matmul %0, %1, %cst {dimension_numbers = #tpu.dot_dimension_numbers<[1], [0], [0], [1], [0, 0, 1, 1], [], []>} : vector<16x32xf32>, vector<32x32xf32>, vector<16x32xf32> -> vector<16x32xf32>
    %c0_3 = arith.constant 0 : index
    %c0_4 = arith.constant 0 : index
    %3 = vector.load %arg3[%c0_3, %c0_4] : memref<1x32xf32, #tpu.memory_space<vmem>>, vector<1x32xf32>
    %4 = vector.broadcast %3 : vector<1x32xf32> to vector<16x32xf32>
    %5 = arith.addf %2, %4 : vector<16x32xf32>
    %c0_5 = arith.constant 0 : index
    %c0_6 = arith.constant 0 : index
    %6 = vector.load %arg4[%c0_5, %c0_6] : memref<16x32xf32, #tpu.memory_space<vmem>>, vector<16x32xf32>
    tpu.vector_store %arg4[%c0_5, %c0_6], %5 {strides = array<i32>} : memref<16x32xf32, #tpu.memory_space<vmem>>, vector<16x32xf32>,
    return
  }
  func.func @transform_0(%arg0: i32) -> (i32, i32) {
    %c0_i32 = arith.constant 0 : i32
    %c0_i32_0 = arith.constant 0 : i32
    return %arg0, %c0_i32 : i32, i32
  }
  func.func @transform_1(%arg0: i32) -> (i32, i32) {
    %c0_i32 = arith.constant 0 : i32
    %c0_i32_0 = arith.constant 0 : i32
    %c0_i32_1 = arith.constant 0 : i32
    return %c0_i32, %c0_i32_0 : i32, i32
  }
  func.func @transform_2(%arg0: i32) -> (i32, i32) {
    %c0_i32 = arith.constant 0 : i32
    %c0_i32_0 = arith.constant 0 : i32
    %c0_i32_1 = arith.constant 0 : i32
    return %c0_i32, %c0_i32_0 : i32, i32
  }
  func.func @transform_3(%arg0: i32) -> (i32, i32) {
    %c0_i32 = arith.constant 0 : i32
    %c0_i32_0 = arith.constant 0 : i32
    return %arg0, %c0_i32 : i32, i32
  }
}

</mosaic_0001>

<llo_original>
// kernel: tpu_custom_call.1
$region0: #{tpu_custom_call.1}
  #allocation0 [shape = 'u32[]', space=smem, size = 0x4, offset = 0x4, fixed_abs, tag = 'smem constant byte address 0x4 - core index']
  #allocation1 [shape = 'u32[144,128]{1,0:T(1,128)}', space=vmem, size = 0x12000, scoped, tag = 'internal scratch']
  %s0 = inlined_call_operand.hbm [shape: f32[16,32], index: 0, kind: input, shape index: {}]
  %s1 = inlined_call_operand.hbm [shape: f32[32,32], index: 1, kind: input, shape index: {}]
  %s2 = inlined_call_operand.vmem [shape: f32[1,32], index: 2, kind: input, shape index: {}]
  %s3 = inlined_call_operand.hbm [shape: f32[16,32], index: 3, kind: output, shape index: {}]
  %s4 = sld [smem:[#allocation0]]
  $region30: #{tpu_custom_call.1} parent=0
    _
  %s6 = ssub.s32 1, %s4
  %s7 = scalar_select 0, %s6, %s4
  $region1: #{tpu_custom_call.1} parent=0
    #allocation2 [shape = 'u8[8192]{0}', space=vmem, size = 0x2000, scoped, tag = 'input window, operand 0, single buffered']
    #allocation3 [shape = 's32[1]{0}', space=sflag, size = 0x4, scoped, tag = 'scoped memory for tpu_custom_call.1']
    #allocation4 [shape = 's32[1]{0}', space=sflag, size = 0x4, scoped, tag = 'scoped memory for tpu_custom_call.1']
    #allocation5 [shape = 'u8[16384]{0}', space=vmem, size = 0x4000, scoped, tag = 'input window, operand 1, single buffered']
    #allocation6 [shape = 's32[1]{0}', space=sflag, size = 0x4, scoped, tag = 'scoped memory for tpu_custom_call.1']
    #allocation7 [shape = 'u8[8192]{0}', space=vmem, size = 0x2000, scoped, tag = 'output window, operand 0, single buffered']
    %8 = vsyncpa [#allocation3], 0
    %9 = vsyncpa [#allocation6], 0
    %10 = vsyncpa [#allocation4], 0
    // Predicated region
    $region2: #{tpu_custom_call.1} parent=1 // pred_check
      _
    $region3: #{tpu_custom_call.1} parent=1 // pred_check_branch
      %12 = sbr.rel (0) target = $region5
    $region4: #{tpu_custom_call.1} parent=1 // pred_region
      %s14 = ssub.s32 256, 256
      %15 = vsyncadd [#allocation3], %s14
      %s16 = sshll.u32 [#allocation2], 4
      %s17 = int_to_ptr.vmem [resolvable:$true] %s16
      %22 = dma.hbm_to_vmem [thread:$0]  %s0, 256, %s17, [#allocation3], 128, 128, 8
    $region5: #{tpu_custom_call.1} parent=1 // pred_fallthru
      _
    // Predicated region
    $region6: #{tpu_custom_call.1} parent=1 // pred_check
      _
    $region7: #{tpu_custom_call.1} parent=1 // pred_check_branch
      %24 = sbr.rel (0) target = $region9
    $region8: #{tpu_custom_call.1} parent=1 // pred_region
      %s26 = ssub.s32 512, 512
      %27 = vsyncadd [#allocation6], %s26
      %s28 = sshll.u32 [#allocation5], 4
      %s29 = int_to_ptr.vmem [resolvable:$true] %s28
      %34 = dma.hbm_to_vmem [thread:$0]  %s1, 512, %s29, [#allocation6], 128, 128, 8
    $region9: #{tpu_custom_call.1} parent=1 // pred_fallthru
      _
    // Predicated region
    $region10: #{tpu_custom_call.1} parent=1 // pred_check
      _
    $region11: #{tpu_custom_call.1} parent=1 // pred_check_branch
      %36 = sbr.rel (0) target = $region13
    $region12: #{tpu_custom_call.1} parent=1 // pred_region
      _
    $region13: #{tpu_custom_call.1} parent=1 // pred_fallthru
      _
    // Predicated region
    $region14: #{tpu_custom_call.1} parent=1 // pred_check
      _
    $region15: #{tpu_custom_call.1} parent=1 // pred_check_branch
      %38 = sbr.rel (0) target = $region17
    $region16: #{tpu_custom_call.1} parent=1 // pred_region
      %39 = dma.done [#allocation3], 256
    $region17: #{tpu_custom_call.1} parent=1 // pred_fallthru
      _
    // Predicated region
    $region18: #{tpu_custom_call.1} parent=1 // pred_check
      _
    $region19: #{tpu_custom_call.1} parent=1 // pred_check_branch
      %41 = sbr.rel (0) target = $region21
    $region20: #{tpu_custom_call.1} parent=1 // pred_region
      %42 = dma.done [#allocation6], 512
    $region21: #{tpu_custom_call.1} parent=1 // pred_fallthru
      _
    %v43 = vld [vmem:[#allocation2] sm:$0xff]
    %v44 = vld [vmem:[#allocation2 + $0x8] sm:$0xff]
    %v45 = vld [vmem:[#allocation5] sm:$0xff]
    %v46 = vld [vmem:[#allocation5 + $0x8] sm:$0xff]
    %v47 = vld [vmem:[#allocation5 + $0x10] sm:$0xff]
    %v48 = vld [vmem:[#allocation5 + $0x18] sm:$0xff]
    %v49 = vld [vmem:[%s2] sm:$0x1]
    %v51 = vlaneseq
    %v52 = vshrl.u32 %v51, 7
    %v53 = vsub.s32 0, %v52
    %v54 = vrot.slane %v49, %v53
    %vm56 = vcmask 261120
    %v58 = vsel %vm56, %v43, 0
    %v61 = vsel %vm56, %v44, 0
    %63 = vmatprep.subr.mxu0 0.0
    %64 = vmatpush1.msra.mxu0 %v45
    %65 = vmatprep.subr.mxu0 0.0
    %66 = vmatpush1.msra.mxu0 %v46
    %67 = vmatprep.subr.mxu0 0.0
    %68 = vmatpush1.msra.mxu0 %v47
    %69 = vmatprep.subr.mxu0 0.0
    %70 = vmatpush1.msra.mxu0 %v48
    %71 = vmatprep.subr.mxu0 0.0
    %72 = vmatpush1.msra.mxu0 0.0
    %73 = vmatprep.subr.mxu0 0.0
    %74 = vmatpush1.msra.mxu0 0.0
    %75 = vmatprep.subr.mxu0 0.0
    %76 = vmatpush1.msra.mxu0 0.0
    %77 = vmatprep.subr.mxu0 0.0
    %78 = vmatpush1.msra.mxu0 0.0
    %79 = vmatprep.subr.mxu0 0.0
    %80 = vmatpush1.msra.mxu0 0.0
    %81 = vmatprep.subr.mxu0 0.0
    %82 = vmatpush1.msra.mxu0 0.0
    %83 = vmatprep.subr.mxu0 0.0
    %84 = vmatpush1.msra.mxu0 0.0
    %85 = vmatprep.subr.mxu0 0.0
    %86 = vmatpush1.msra.mxu0 0.0
    %87 = vmatprep.subr.mxu0 0.0
    %88 = vmatpush1.msra.mxu0 0.0
    %89 = vmatprep.subr.mxu0 0.0
    %90 = vmatpush1.msra.mxu0 0.0
    %91 = vmatprep.subr.mxu0 0.0
    %92 = vmatpush1.msra.mxu0 0.0
    %93 = vmatprep.subr.mxu0 0.0
    %94 = vmatpush1.msra.mxu0 0.0
    %95 = vmatprep.subr.mxu0 0.0
    %96 = vmatpush1.msra.mxu0 0.0
    %97 = vmatprep.subr.mxu0 0.0
    %98 = vmatpush1.msra.mxu0 0.0
    %99 = vmatprep.subr.mxu0 0.0
    %100 = vmatpush1.msra.mxu0 0.0
    %101 = vmatprep.subr.mxu0 0.0
    %102 = vmatpush1.msra.mxu0 0.0
    %103 = vmatprep.subr.mxu0 0.0
    %104 = vmatpush1.msra.mxu0 0.0
    %105 = vmatprep.subr.mxu0 0.0
    %106 = vmatpush1.msra.mxu0 0.0
    %107 = vmatprep.subr.mxu0 0.0
    %108 = vmatpush1.msra.mxu0 0.0
    %109 = vmatprep.subr.mxu0 0.0
    %110 = vmatpush1.msra.mxu0 0.0
    %111 = vmatprep.subr.mxu0 0.0
    %112 = vmatpush1.msra.mxu0 0.0
    %113 = vmatprep.subr.mxu0 0.0
    %114 = vmatpush1.msra.mxu0 0.0
    %115 = vmatprep.subr.mxu0 0.0
    %116 = vmatpush1.msra.mxu0 0.0
    %117 = vmatprep.subr.mxu0 0.0
    %118 = vmatpush1.msra.mxu0 0.0
    %119 = vmatprep.subr.mxu0 0.0
    %120 = vmatpush1.msra.mxu0 0.0
    %121 = vmatprep.subr.mxu0 0.0
    %122 = vmatpush1.msra.mxu0 0.0
    %123 = vmatprep.subr.mxu0 0.0
    %124 = vmatpush1.msra.mxu0 0.0
    %125 = vmatprep.subr.mxu0 0.0
    %126 = vmatpush1.msra.mxu0 0.0
    %127 = vmatprep.mubr.f32.mxu0 0.0
    %128 = vmatmul.mubr.f32.gmra.mrb[0].mxu0 %v58
    %v129 = vpop.f32.mrb[0].mxu0
    %v130 = vadd.f32 %v54, %v129
    %v131 = vpop.f32.mrb[0].mxu0
    %132 = vmatprep.mubr.f32.mxu0 0.0
    %133 = vmatmul.mubr.f32.gmra.mrb[0].mxu0 %v61
    %v134 = vpop.f32.mrb[0].mxu0
    %v135 = vadd.f32 %v54, %v134
    %v136 = vpop.f32.mrb[0].mxu0
    %137 = vdwg.mxu0
    %138 = vst.msk [vmem:[#allocation7] sm:$0xff] %vm56, %v130
    %139 = vst.msk [vmem:[#allocation7 + $0x8] sm:$0xff] %vm56, %v135
    // Predicated region
    $region22: #{tpu_custom_call.1} parent=1 // pred_check
      _
    $region23: #{tpu_custom_call.1} parent=1 // pred_check_branch
      %141 = sbr.rel (0) target = $region25
    $region24: #{tpu_custom_call.1} parent=1 // pred_region
      %s143 = ssub.s32 256, 256
      %144 = vsyncadd [#allocation4], %s143
      %s145 = sshll.u32 [#allocation7], 4
      %s146 = int_to_ptr.vmem [resolvable:$true] %s145
      %151 = dma.vmem_to_hbm [thread:$0]  %s146, 256, %s3, [#allocation4], 128, 128, 8
    $region25: #{tpu_custom_call.1} parent=1 // pred_fallthru
      _
    // Predicated region
    $region26: #{tpu_custom_call.1} parent=1 // pred_check
      _
    $region27: #{tpu_custom_call.1} parent=1 // pred_check_branch
      %153 = sbr.rel (0) target = $region29
    $region28: #{tpu_custom_call.1} parent=1 // pred_region
      %154 = dma.done [#allocation4], 256
    $region29: #{tpu_custom_call.1} parent=1 // pred_fallthru
      _
    %155 = vsyncpa [#allocation3], 1
    %156 = vsyncpa [#allocation6], 1
    %157 = vsyncpa [#allocation4], 1

</llo_original>
